<compile_context>
chip_gen: v5e
topology: v5e:2x2
jax: 0.10.0
libtpu: 0.0.40
codegen_flags: <defaults>
</compile_context>

<pallas_src>
import functools

import jax
import jax.numpy as jnp
from jax.experimental import pallas as pl
from jax.experimental.pallas import tpu as pltpu


_INV_SQRT2 = 0.7071067811865476


def _exact_gelu(x):
    # nn.GELU() default: 0.5 * x * (1 + erf(x / sqrt(2))).
    # TODO(synk): if a bundle dump shows VALU-bound when compute-bound, the
    # tanh-approximate GELU (EUP tanh) is ~5-15% faster but changes semantics.
    return 0.5 * x * (1.0 + jax.lax.erf(x * _INV_SQRT2))


def _round_up(x, m):
    return ((x + m - 1) // m) * m


def _cdiv(a, b):
    return (a + b - 1) // b


def _tpu_vmem_bytes():
    """Physical VMEM capacity (trace-time query), with a safe fallback."""
    try:
        info = pltpu.get_tpu_info()
        cap = getattr(info, "vmem_capacity_bytes", None)
        if cap:
            return int(cap)
    except Exception:
        pass
    return 64 * 1024 * 1024  # conservative (v7x-sized)


def feedforward_kernel(x_ref, w1_ref, b1_ref, w2_ref, b2_ref, o_ref, acc_ref):
    """Grid = (row tiles, inner-dim tiles).  acc = sum_k gelu(x@W1_k+b1_k)@W2_k."""
    k = pl.program_id(1)

    @pl.when(k == 0)
    def _():
        acc_ref[...] = jnp.zeros_like(acc_ref)

    # First matmul on the MXU (x already in the compute dtype), f32 accumulate.
    h = jnp.dot(x_ref[...], w1_ref[...], preferred_element_type=jnp.float32)
    h = h + b1_ref[...]                                       # (tm, ti) f32
    h = _exact_gelu(h)

    # Second matmul: accumulate this inner-dim slab into the f32 scratch.
    acc_ref[...] += jnp.dot(h.astype(w2_ref.dtype), w2_ref[...],
                            preferred_element_type=jnp.float32)

    @pl.when(k == pl.num_programs(1) - 1)
    def _():
        # TODO(synk): dropout omitted (inference mode -> identity).
        o_ref[...] = (acc_ref[...] + b2_ref[...]).astype(o_ref.dtype)


@functools.partial(jax.jit,
                   static_argnames=("tm", "ti", "compute_dtype", "out_dtype"))
def feedforward(x, w1, b1, w2, b2, *, tm=None, ti=512,
                compute_dtype=jnp.bfloat16, out_dtype=None):
    """x: (B, T, E).  w1: (E, I), b1: (1, I), w2: (I, E), b2: (1, E)."""
    B, T, E = x.shape
    E_in, I = w1.shape
    assert E_in == E
    M = B * T

    compute_dtype = jnp.dtype(compute_dtype)
    out_dtype = jnp.dtype(x.dtype if out_dtype is None else out_dtype)

    # --- generation-aware defaults -------------------------------------------
    vmem_cap = _tpu_vmem_bytes()
    vmem_limit = int(0.85 * vmem_cap)            # never request full physical VMEM
    if tm is None:
        # Big-VMEM chips (v5e/v6e, 128 MiB) can afford the larger row tile that
        # crosses the v6e weight-BW ridge; v7x (64 MiB) uses tm=512.
        tm = 768 if vmem_cap >= 100 * 1024 * 1024 else 512

    # --- tiling / padding -----------------------------------------------------
    E_pad = _round_up(E, 128)                    # lane-dense output stores

    row_align = 16 if compute_dtype == jnp.bfloat16 else 8   # sublane packing
    if M >= 128:
        row_align = 128                          # full MXU passes, unmasked stores

    tm_eff = max(row_align, min(tm, _round_up(M, row_align)))
    tm_eff = _round_up(tm_eff, row_align)
    # Give the "parallel" row axis >= 2 tiles when M allows (v7x megacore).
    if _round_up(M, tm_eff) // tm_eff < 2 and _round_up(M, row_align) >= 2 * row_align:
        tm_eff = _round_up(_cdiv(_round_up(M, row_align), 2), row_align)
    M_pad = _round_up(M, tm_eff)

    ti_eff = max(128, min(ti, _round_up(I, 128)))
    ti_eff = _round_up(ti_eff, 128)
    I_pad = _round_up(I, ti_eff)

    # x shipped in the compute dtype (halves HBM traffic + VMEM when bf16).
    x2d = jnp.pad(x.reshape(M, E).astype(compute_dtype),
                  ((0, M_pad - M), (0, E_pad - E)))
    w1_p = jnp.pad(w1, ((0, E_pad - E), (0, I_pad - I))).astype(compute_dtype)
    b1_p = jnp.pad(b1, ((0, 0), (0, I_pad - I))).astype(jnp.float32)
    w2_p = jnp.pad(w2, ((0, I_pad - I), (0, E_pad - E))).astype(compute_dtype)
    b2_p = jnp.pad(b2, ((0, 0), (0, E_pad - E))).astype(jnp.float32)

    grid = (M_pad // tm_eff, I_pad // ti_eff)
    n_row_tiles = grid[0]

    w_bytes = (w1_p.size + w2_p.size) * compute_dtype.itemsize
    b_bytes = (b1_p.size + b2_p.size) * 4
    cost = pl.CostEstimate(
        flops=4 * M_pad * E_pad * I_pad,          # two matmuls, 2 flops/MAC
        transcendentals=M_pad * I_pad,            # erf per inner activation
        bytes_accessed=(x2d.size * compute_dtype.itemsize
                        + M_pad * E_pad * out_dtype.itemsize
                        + n_row_tiles * (w_bytes + b_bytes)))

    out2d = pl.pallas_call(
        feedforward_kernel,
        out_shape=jax.ShapeDtypeStruct((M_pad, E_pad), out_dtype),
        grid_spec=pltpu.PrefetchScalarGridSpec(
            num_scalar_prefetch=0,
            grid=grid,
            in_specs=[
                pl.BlockSpec((tm_eff, E_pad), lambda i, k: (i, 0)),   # x rows
                pl.BlockSpec((E_pad, ti_eff), lambda i, k: (0, k)),   # W1 k-slab
                pl.BlockSpec((1, ti_eff),     lambda i, k: (0, k)),   # b1 k-slab
                pl.BlockSpec((ti_eff, E_pad), lambda i, k: (k, 0)),   # W2 k-slab
                pl.BlockSpec((1, E_pad),      lambda i, k: (0, 0)),   # b2
            ],
            out_specs=pl.BlockSpec((tm_eff, E_pad), lambda i, k: (i, 0)),
            scratch_shapes=[pltpu.VMEM((tm_eff, E_pad), jnp.float32)],
        ),
        compiler_params=pltpu.CompilerParams(
            dimension_semantics=("parallel", "arbitrary"),
            vmem_limit_bytes=vmem_limit),
        cost_estimate=cost,
    )(x2d, w1_p, b1_p, w2_p, b2_p)

    return out2d[:M, :E].reshape(B, T, E)


def reference_f32(x, w1, b1, w2, b2):
    h = x @ w1 + b1[0]
    h = jax.nn.gelu(h, approximate=False)
    return h @ w2 + b2[0]


def reference_bf16(x, w1, b1, w2, b2):
    h = jnp.dot(x.astype(jnp.bfloat16), w1.astype(jnp.bfloat16),
                preferred_element_type=jnp.float32) + b1[0]
    h = jax.nn.gelu(h, approximate=False)
    return jnp.dot(h.astype(jnp.bfloat16), w2.astype(jnp.bfloat16),
                   preferred_element_type=jnp.float32) + b2[0]


if __name__ == "__main__":
    # Small shapes consistent with the module: batch=2, seq=8, embed=32,
    # expansion=6 -> inner=192, BAIS=True, dropout identity at eval.
    B, T, E = 2, 8, 32
    expansion = 6
    I = E * expansion

    key = jax.random.PRNGKey(0)
    kx, k1, kb1, k2, kb2 = jax.random.split(key, 5)

    x = jax.random.normal(kx, (B, T, E), dtype=jnp.float32)
    # Weights stored already-transposed as (in, out): y = x @ W + b.
    w1 = jax.random.normal(k1, (E, I), dtype=jnp.float32) * (1.0 / jnp.sqrt(E))
    b1 = jax.random.normal(kb1, (1, I), dtype=jnp.float32) * 0.01
    w2 = jax.random.normal(k2, (I, E), dtype=jnp.float32) * (1.0 / jnp.sqrt(I))
    b2 = jax.random.normal(kb2, (1, E), dtype=jnp.float32) * 0.01

    # 1) Optimized bf16-MXU path (default), ti=128 so the inner-dim reduction
    #    grid axis (accumulator init/finalize) is actually exercised.
    out_bf16 = feedforward(x, w1, b1, w2, b2, ti=128)
    jax.block_until_ready(out_bf16)
    ref_b = reference_bf16(x.reshape(-1, E), w1, b1, w2, b2).reshape(B, T, E)
    assert out_bf16.shape == (B, T, E)
    assert jnp.allclose(out_bf16, ref_b, atol=5e-3, rtol=5e-3), "bf16 mismatch"

    # 2) Exact-semantics f32 path, small tiles so both grid axes have >1 step.
    out_f32 = feedforward(x, w1, b1, w2, b2, tm=8, ti=128,
                          compute_dtype=jnp.float32)
    jax.block_until_ready(out_f32)
    ref_f = reference_f32(x.reshape(-1, E), w1, b1, w2, b2).reshape(B, T, E)
    assert jnp.allclose(out_f32, ref_f, atol=1e-4, rtol=1e-4), "f32 mismatch"

    print("KERNEL_OK")
</pallas_src>

<mosaic_0001>
module attributes {stable_mosaic.version = 11 : i64} {
  func.func @feedforward_kernel(%arg0: i32, %arg1: i32, %arg2: memref<16x128xbf16, #tpu.memory_space<vmem>>, %arg3: memref<128x128xbf16, #tpu.memory_space<vmem>>, %arg4: memref<1x128xf32, #tpu.memory_space<vmem>>, %arg5: memref<128x128xbf16, #tpu.memory_space<vmem>>, %arg6: memref<1x128xf32, #tpu.memory_space<vmem>>, %arg7: memref<16x128xf32, #tpu.memory_space<vmem>>, %arg8: memref<16x128xf32, #tpu.memory_space<vmem>>) attributes {dimension_semantics = [#tpu.dimension_semantics<parallel>, #tpu.dimension_semantics<arbitrary>], iteration_bounds = array<i64: 1, 2>, scalar_prefetch = 0 : i64, scratch_operands = 1 : i64, tpu.core_type = #tpu.core_type<tc>, window_params = [{transform_indices = @transform_0, window_bounds = array<i64: 16, 128>}, {transform_indices = @transform_1, window_bounds = array<i64: 128, 128>}, {transform_indices = @transform_2, window_bounds = array<i64: 1, 128>}, {transform_indices = @transform_3, window_bounds = array<i64: 128, 128>}, {pipeline_mode = #tpu.pipeline_mode<synchronous>, transform_indices = @transform_4, window_bounds = array<i64: 1, 128>}, {transform_indices = @transform_5, window_bounds = array<i64: 16, 128>}]} {
    %c0_i32 = arith.constant 0 : i32
    %0 = arith.cmpi eq, %arg1, %c0_i32 : i32
    %1 = arith.extui %0 : i1 to i32
    %c0_i32_0 = arith.constant 0 : i32
    %2 = arith.cmpi ne, %1, %c0_i32_0 : i32
    scf.if %2 {
      %cst_17 = arith.constant 0.000000e+00 : f32
      %26 = vector.broadcast %cst_17 : f32 to vector<16x128xf32>
      %c0_18 = arith.constant 0 : index
      %c0_19 = arith.constant 0 : index
      %27 = vector.load %arg8[%c0_18, %c0_19] : memref<16x128xf32, #tpu.memory_space<vmem>>, vector<16x128xf32>
      tpu.vector_store %arg8[%c0_18, %c0_19], %26 {strides = array<i32>} : memref<16x128xf32, #tpu.memory_space<vmem>>, vector<16x128xf32>,
    } else {
    }
    %c0 = arith.constant 0 : index
    %c0_1 = arith.constant 0 : index
    %3 = vector.load %arg2[%c0, %c0_1] : memref<16x128xbf16, #tpu.memory_space<vmem>>, vector<16x128xbf16>
    %c0_2 = arith.constant 0 : index
    %c0_3 = arith.constant 0 : index
    %4 = vector.load %arg3[%c0_2, %c0_3] : memref<128x128xbf16, #tpu.memory_space<vmem>>, vector<128x128xbf16>
    %cst = arith.constant dense<0.000000e+00> : vector<16x128xf32>
    %5 = tpu.matmul %3, %4, %cst {dimension_numbers = #tpu.dot_dimension_numbers<[1], [0], [0], [1], [0, 0, 1, 1], [], []>} : vector<16x128xbf16>, vector<128x128xbf16>, vector<16x128xf32> -> vector<16x128xf32>
    %c0_4 = arith.constant 0 : index
    %c0_5 = arith.constant 0 : index
    %6 = vector.load %arg4[%c0_4, %c0_5] : memref<1x128xf32, #tpu.memory_space<vmem>>, vector<1x128xf32>
    %7 = vector.broadcast %6 : vector<1x128xf32> to vector<16x128xf32>
    %8 = arith.addf %5, %7 : vector<16x128xf32>
    %cst_6 = arith.constant 5.000000e-01 : f32
    %9 = vector.broadcast %cst_6 : f32 to vector<16x128xf32>
    %10 = arith.mulf %9, %8 : vector<16x128xf32>
    %cst_7 = arith.constant 0.707106769 : f32
    %11 = vector.broadcast %cst_7 : f32 to vector<16x128xf32>
    %12 = arith.mulf %8, %11 : vector<16x128xf32>
    %13 = math.erf %12 : vector<16x128xf32>
    %cst_8 = arith.constant 1.000000e+00 : f32
    %14 = vector.broadcast %cst_8 : f32 to vector<16x128xf32>
    %15 = arith.addf %14, %13 : vector<16x128xf32>
    %16 = arith.mulf %10, %15 : vector<16x128xf32>
    %c0_9 = arith.constant 0 : index
    %c0_10 = arith.constant 0 : index
    %17 = vector.load %arg8[%c0_9, %c0_10] : memref<16x128xf32, #tpu.memory_space<vmem>>, vector<16x128xf32>
    %18 = arith.truncf %16 : vector<16x128xf32> to vector<16x128xbf16>
    %c0_11 = arith.constant 0 : index
    %c0_12 = arith.constant 0 : index
    %19 = vector.load %arg5[%c0_11, %c0_12] : memref<128x128xbf16, #tpu.memory_space<vmem>>, vector<128x128xbf16>
    %cst_13 = arith.constant dense<0.000000e+00> : vector<16x128xf32>
    %20 = tpu.matmul %18, %19, %cst_13 {dimension_numbers = #tpu.dot_dimension_numbers<[1], [0], [0], [1], [0, 0, 1, 1], [], []>} : vector<16x128xbf16>, vector<128x128xbf16>, vector<16x128xf32> -> vector<16x128xf32>
    %21 = arith.addf %17, %20 : vector<16x128xf32>
    %c0_14 = arith.constant 0 : index
    %c0_15 = arith.constant 0 : index
    %22 = vector.load %arg8[%c0_14, %c0_15] : memref<16x128xf32, #tpu.memory_space<vmem>>, vector<16x128xf32>
    tpu.vector_store %arg8[%c0_14, %c0_15], %21 {strides = array<i32>} : memref<16x128xf32, #tpu.memory_space<vmem>>, vector<16x128xf32>,
    %c1_i32 = arith.constant 1 : i32
    %23 = arith.cmpi eq, %arg1, %c1_i32 : i32
    %24 = arith.extui %23 : i1 to i32
    %c0_i32_16 = arith.constant 0 : i32
    %25 = arith.cmpi ne, %24, %c0_i32_16 : i32
    scf.if %25 {
      %c0_17 = arith.constant 0 : index
      %c0_18 = arith.constant 0 : index
      %26 = vector.load %arg8[%c0_17, %c0_18] : memref<16x128xf32, #tpu.memory_space<vmem>>, vector<16x128xf32>
      %c0_19 = arith.constant 0 : index
      %c0_20 = arith.constant 0 : index
      %27 = vector.load %arg6[%c0_19, %c0_20] : memref<1x128xf32, #tpu.memory_space<vmem>>, vector<1x128xf32>
      %28 = vector.broadcast %27 : vector<1x128xf32> to vector<16x128xf32>
      %29 = arith.addf %26, %28 : vector<16x128xf32>
      %c0_21 = arith.constant 0 : index
      %c0_22 = arith.constant 0 : index
      %30 = vector.load %arg7[%c0_21, %c0_22] : memref<16x128xf32, #tpu.memory_space<vmem>>, vector<16x128xf32>
      tpu.vector_store %arg7[%c0_21, %c0_22], %29 {strides = array<i32>} : memref<16x128xf32, #tpu.memory_space<vmem>>, vector<16x128xf32>,
    } else {
    }
    return
  }
  func.func @transform_0(%arg0: i32, %arg1: i32) -> (i32, i32) {
    %c0_i32 = arith.constant 0 : i32
    %c0_i32_0 = arith.constant 0 : i32
    return %arg0, %c0_i32 : i32, i32
  }
  func.func @transform_1(%arg0: i32, %arg1: i32) -> (i32, i32) {
    %c0_i32 = arith.constant 0 : i32
    %c0_i32_0 = arith.constant 0 : i32
    return %c0_i32, %arg1 : i32, i32
  }
  func.func @transform_2(%arg0: i32, %arg1: i32) -> (i32, i32) {
    %c0_i32 = arith.constant 0 : i32
    %c0_i32_0 = arith.constant 0 : i32
    return %c0_i32, %arg1 : i32, i32
  }
  func.func @transform_3(%arg0: i32, %arg1: i32) -> (i32, i32) {
    %c0_i32 = arith.constant 0 : i32
    %c0_i32_0 = arith.constant 0 : i32
    return %arg1, %c0_i32 : i32, i32
  }
  func.func @transform_4(%arg0: i32, %arg1: i32) -> (i32, i32) {
    %c0_i32 = arith.constant 0 : i32
    %c0_i32_0 = arith.constant 0 : i32
    %c0_i32_1 = arith.constant 0 : i32
    return %c0_i32, %c0_i32_0 : i32, i32
  }
  func.func @transform_5(%arg0: i32, %arg1: i32) -> (i32, i32) {
    %c0_i32 = arith.constant 0 : i32
    %c0_i32_0 = arith.constant 0 : i32
    return %arg0, %c0_i32 : i32, i32
  }
}

</mosaic_0001>

<llo_original>
// kernel: feedforward.1
$region0: #{feedforward.1}
  #allocation0 [shape = 'u32[]', space=smem, size = 0x4, offset = 0x4, fixed_abs, tag = 'smem constant byte address 0x4 - core index']
  #allocation1 [shape = 'u32[72,128]{1,0:T(1,128)}', space=vmem, size = 0x9000, scoped, tag = 'internal scratch']
  #allocation2 [shape = 'f32[16,128]{1,0:T(8,128)}', space=vmem, size = 0x2000, scoped, tag = 'scratch operand']
  %s0 = inlined_call_operand.vmem [shape: bf16[16,128], index: 0, kind: input, shape index: {}]
  %s1 = inlined_call_operand.vmem [shape: bf16[128,256], index: 1, kind: input, shape index: {}]
  %s2 = inlined_call_operand.vmem [shape: f32[1,256], index: 2, kind: input, shape index: {}]
  %s3 = inlined_call_operand.vmem [shape: bf16[256,128], index: 3, kind: input, shape index: {}]
  %s4 = inlined_call_operand.vmem [shape: f32[1,128], index: 4, kind: input, shape index: {}]
  %s5 = inlined_call_operand.vmem [shape: f32[16,128], index: 5, kind: output, shape index: {}]
  %s6 = sld [smem:[#allocation0]]
  $region102: #{feedforward.1} parent=0
    _
  %s8 = ssub.s32 1, %s6
  %s9 = scalar_select 0, %s8, %s6
  $region1: #{feedforward.1} parent=0
    #allocation3 [shape = 'u8[65536]{0}', space=vmem, size = 0x10000, scoped, tag = 'input window, operand 1']
    loop: start=0, step=1, limit=4
    $region2: #{feedforward.1} parent=1 // loop_pre_header
      _
    $region3: #{feedforward.1} parent=1 // loop_header
      %s11 = sphi 0, %s15
      %p12 = scmp.ge.s32.totalorder %s11, 4
      %s18 = sphi 0, %s30
      %s19 = sphi 0, %s26
      %s20 = sphi 0, %s18
      %s21 = sphi 0, %s19
      %s22 = sphi 0, %s20
      %s23 = sphi 0, %s21
      %s33 = sphi 0, %s35
      %s36 = sphi 0, %s33
      %s37 = sphi 0, %s36
      %s53 = sphi 0, %s37
      %s59 = sphi 0, %s61
      %s62 = sphi 0, %s59
      %s63 = sphi 0, %s62
      %s79 = sphi 0, %s63
      %s85 = sphi 0, %s87
      %s88 = sphi 0, %s85
      %s89 = sphi 0, %s88
      %s105 = sphi 0, %s89
      %s111 = sphi 0, %s113
      %s114 = sphi 0, %s111
      %s115 = sphi 0, %s114
      %s131 = sphi 0, %s115
      %s135 = sphi 0, %s135
      %s137 = sphi 0, %s135
      %s138 = sphi 0, %s137
      %s152 = sphi 0, %s138
      %s158 = sphi 0, %s160
      %s161 = sphi 0, %s158
      %s162 = sphi 0, %s161
      %s178 = sphi 0, %s162
    $region4: #{feedforward.1} parent=1 // loop_header_branch
      %14 = sbr.rel (%p12) target = $region8
    $region5: #{feedforward.1} parent=1 // loop_body
      %s16 = ssub.s32 %s11, 1
      %s17 = ssub.s32 %s11, 2
      %s24 = sadd.s32 1, %s19
      %p25 = scmp.ge.s32.totalorder %s24, 2
      %s26 = scalar_select %p25, 0, %s24
      %s27 = sadd.s32 1, %s18
      %s28 = scalar_select %p25, %s27, %s18
      %p29 = scmp.ge.s32.totalorder %s28, 1
      %s30 = scalar_select %p29, 0, %s28
      %s31 = ssub.s32 %s18, %s30
      %p32 = scmp.eq.s32.totalorder %s31, 0
      %s34 = sadd.s32 %s33, 1
      %s35 = scalar_select %p32, %s33, %s34
      %p38 = pneg %p32
      %p39 = scmp.eq.s32.totalorder %s11, 1
      %p40 = por %p38, %p39
      %p41 = scmp.ne.s32.totalorder %s33, %s36
      %p42 = scmp.eq.s32.totalorder %s11, 0
      %p43 = por %p41, %p42
      %p44 = scmp.ne.s32.totalorder %s33, %s36
      %p45 = scmp.eq.s32.totalorder %s16, 1
      %p46 = por %p44, %p45
      %p47 = scmp.ne.s32.totalorder %s36, %s37
      %p48 = scmp.eq.s32.totalorder %s16, 0
      %p49 = por %p47, %p48
      %p50 = scmp.ne.s32.totalorder %s36, %s37
      %p51 = scmp.eq.s32.totalorder %s17, 1
      %p52 = por %p50, %p51
      %p54 = scmp.ne.s32.totalorder %s37, %s53
      %p55 = scmp.eq.s32.totalorder %s17, 0
      %p56 = por %p54, %p55
      %s57 = ssub.s32 %s19, %s26
      %p58 = scmp.eq.s32.totalorder %s57, 0
      %s60 = sadd.s32 %s59, 1
      %s61 = scalar_select %p58, %s59, %s60
      %p64 = pneg %p58
      %p65 = scmp.eq.s32.totalorder %s11, 1
      %p66 = por %p64, %p65
      %p67 = scmp.ne.s32.totalorder %s59, %s62
      %p68 = scmp.eq.s32.totalorder %s11, 0
      %p69 = por %p67, %p68
      %p70 = scmp.ne.s32.totalorder %s59, %s62
      %p71 = scmp.eq.s32.totalorder %s16, 1
      %p72 = por %p70, %p71
      %p73 = scmp.ne.s32.totalorder %s62, %s63
      %p74 = scmp.eq.s32.totalorder %s16, 0
      %p75 = por %p73, %p74
      %p76 = scmp.ne.s32.totalorder %s62, %s63
      %p77 = scmp.eq.s32.totalorder %s17, 1
      %p78 = por %p76, %p77
      %p80 = scmp.ne.s32.totalorder %s63, %s79
      %p81 = scmp.eq.s32.totalorder %s17, 0
      %p82 = por %p80, %p81
      %s83 = ssub.s32 %s19, %s26
      %p84 = scmp.eq.s32.totalorder %s83, 0
      %s86 = sadd.s32 %s85, 1
      %s87 = scalar_select %p84, %s85, %s86
      %p90 = pneg %p84
      %p91 = scmp.eq.s32.totalorder %s11, 1
      %p92 = por %p90, %p91
      %p93 = scmp.ne.s32.totalorder %s85, %s88
      %p94 = scmp.eq.s32.totalorder %s11, 0
      %p95 = por %p93, %p94
      %p96 = scmp.ne.s32.totalorder %s85, %s88
      %p97 = scmp.eq.s32.totalorder %s16, 1
      %p98 = por %p96, %p97
      %p99 = scmp.ne.s32.totalorder %s88, %s89
      %p100 = scmp.eq.s32.totalorder %s16, 0
      %p101 = por %p99, %p100
      %p102 = scmp.ne.s32.totalorder %s88, %s89
      %p103 = scmp.eq.s32.totalorder %s17, 1
      %p104 = por %p102, %p103
      %p106 = scmp.ne.s32.totalorder %s89, %s105
      %p107 = scmp.eq.s32.totalorder %s17, 0
      %p108 = por %p106, %p107
      %s109 = ssub.s32 %s19, %s26
      %p110 = scmp.eq.s32.totalorder %s109, 0
      %s112 = sadd.s32 %s111, 1
      %s113 = scalar_select %p110, %s111, %s112
      %p116 = pneg %p110
      %p117 = scmp.eq.s32.totalorder %s11, 1
      %p118 = por %p116, %p117
      %p119 = scmp.ne.s32.totalorder %s111, %s114
      %p120 = scmp.eq.s32.totalorder %s11, 0
      %p121 = por %p119, %p120
      %p122 = scmp.ne.s32.totalorder %s111, %s114
      %p123 = scmp.eq.s32.totalorder %s16, 1
      %p124 = por %p122, %p123
      %p125 = scmp.ne.s32.totalorder %s114, %s115
      %p126 = scmp.eq.s32.totalorder %s16, 0
      %p127 = por %p125, %p126
      %p128 = scmp.ne.s32.totalorder %s114, %s115
      %p129 = scmp.eq.s32.totalorder %s17, 1
      %p130 = por %p128, %p129
      %p132 = scmp.ne.s32.totalorder %s115, %s131
      %p133 = scmp.eq.s32.totalorder %s17, 0
      %p134 = por %p132, %p133
      %s136 = sadd.s32 %s135, 1
      %p139 = scmp.eq.s32.totalorder %s11, 1
      %p140 = scmp.ne.s32.totalorder %s135, %s137
      %p141 = scmp.eq.s32.totalorder %s11, 0
      %p142 = por %p140, %p141
      %p143 = scmp.ne.s32.totalorder %s135, %s137
      %p144 = scmp.eq.s32.totalorder %s16, 1
      %p145 = por %p143, %p144
      %p146 = scmp.ne.s32.totalorder %s137, %s138
      %p147 = scmp.eq.s32.totalorder %s16, 0
      %p148 = por %p146, %p147
      %p149 = scmp.ne.s32.totalorder %s137, %s138
      %p150 = scmp.eq.s32.totalorder %s17, 1
      %p151 = por %p149, %p150
      %p153 = scmp.ne.s32.totalorder %s138, %s152
      %p154 = scmp.eq.s32.totalorder %s17, 0
      %p155 = por %p153, %p154
      %s156 = ssub.s32 %s18, %s30
      %p157 = scmp.eq.s32.totalorder %s156, 0
      %s159 = sadd.s32 %s158, 1
      %s160 = scalar_select %p157, %s158, %s159
      %p163 = pneg %p157
      %p164 = scmp.eq.s32.totalorder %s11, 1
      %p165 = por %p163, %p164
      %p166 = scmp.ne.s32.totalorder %s158, %s161
      %p167 = scmp.eq.s32.totalorder %s11, 0
      %p168 = por %p166, %p167
      %p169 = scmp.ne.s32.totalorder %s158, %s161
      %p170 = scmp.eq.s32.totalorder %s16, 1
      %p171 = por %p169, %p170
      %p172 = scmp.ne.s32.totalorder %s161, %s162
      %p173 = scmp.eq.s32.totalorder %s16, 0
      %p174 = por %p172, %p173
      %p175 = scmp.ne.s32.totalorder %s161, %s162
      %p176 = scmp.eq.s32.totalorder %s17, 1
      %p177 = por %p175, %p176
      %p179 = scmp.ne.s32.totalorder %s162, %s178
      %p180 = scmp.eq.s32.totalorder %s17, 0
      %p181 = por %p179, %p180
      %p182 = scmp.le.s32.totalorder 1, %s11
      %p183 = scmp.lt.s32.totalorder %s11, 3
      %p184 = pnand %p182, %p183
      %p185 = pneg %p184
      // Predicated region
      $region9: #{feedforward.1} parent=5 // pred_check
        _
      $region10: #{feedforward.1} parent=5 // pred_check_branch
        %187 = sbr.rel (%p184) target = $region12
      $region11: #{feedforward.1} parent=5 // pred_region
        %s188 = ssub.s32 %s11, 1
        // Predicated region
        $region13: #{feedforward.1} parent=11 // pred_check
          %p189 = pneg %p49
        $region14: #{feedforward.1} parent=11 // pred_check_branch
          %191 = sbr.rel (%p189) target = $region16
        $region15: #{feedforward.1} parent=11 // pred_region
          %s192 = smul.u32 2, %s20
          %p193 = scmp.lt.s32.totalorder %s192, 1
          %s194 = scalar_select %p193, %s192, 1
          %s195 = smul.addr %s194, 4
          %s196 = scalar_lea.vmem %s0, %s195
          %s197 = smul.u32 2, %s20
        $region16: #{feedforward.1} parent=11 // pred_fallthru
          _
        // Predicated region
        $region17: #{feedforward.1} parent=11 // pred_check
          %p198 = pneg %p148
        $region18: #{feedforward.1} parent=11 // pred_check_branch
          %200 = sbr.rel (%p198) target = $region20
        $region19: #{feedforward.1} parent=11 // pred_region
          _
        $region20: #{feedforward.1} parent=11 // pred_fallthru
          _
      $region12: #{feedforward.1} parent=5 // pred_fallthru
        _
      %p201 = scmp.lt.s32.totalorder %s11, 2
      // Predicated region
      $region21: #{feedforward.1} parent=5 // pred_check
        %p202 = pneg %p201
      $region22: #{feedforward.1} parent=5 // pred_check_branch
        %204 = sbr.rel (%p202) target = $region24
      $region23: #{feedforward.1} parent=5 // pred_region
        // Predicated region
        $region25: #{feedforward.1} parent=23 // pred_check
          %p205 = pneg %p69
        $region26: #{feedforward.1} parent=23 // pred_check_branch
          %207 = sbr.rel (%p205) target = $region28
        $region27: #{feedforward.1} parent=23 // pred_region
          %s208 = sand.u32 %s59, 1
          %s209 = sand.u32 %s59, 1
          %s210 = smul.addr %s209, 64
          %s211 = scalar_lea.vmem [#allocation3], %s210
          %s212 = smul.addr %s19, 4
          %s213 = scalar_lea.vmem %s1, %s212
          // Predicated region
          $region29: #{feedforward.1} parent=27 // pred_check
            _
          $region30: #{feedforward.1} parent=27 // pred_check_branch
            %215 = sbr.rel (0) target = $region32
          $region31: #{feedforward.1} parent=27 // pred_region
            // Predicated region
            $region33: #{feedforward.1} parent=31 // pred_check
              _
            $region34: #{feedforward.1} parent=31 // pred_check_branch
              %217 = sbr.rel target = $region36
            $region35: #{feedforward.1} parent=31 // pred_region
              // Predicated region
              $region48: #{feedforward.1} parent=35 // pred_check
                _
              $region49: #{feedforward.1} parent=35 // pred_check_branch
                %263 = sbr.rel (0) target = $region51
              $region50: #{feedforward.1} parent=35 // pred_region
                loop: start=0, step=1, limit=1
                $region52: #{feedforward.1} parent=50 // loop_pre_header
                  _
                $region53: #{feedforward.1} parent=50 // loop_header
                  %s265 = sphi 0, %s269
                  %p266 = scmp.ge.s32.totalorder %s265, 1
                  %s270 = sphi %s213, %s213
                  %s271 = sphi %s211, %s211
                $region54: #{feedforward.1} parent=50 // loop_header_branch
                  %268 = sbr.rel (%p266) target = $region58
                $region55: #{feedforward.1} parent=50 // loop_body
                  _
                $region56: #{feedforward.1} parent=50 // loop_footer
                  %s269 = sadd.s32 1, %s265
                $region57: #{feedforward.1} parent=50 // loop_footer_branch
                  %264 = sbr.rel target = $region53
                $region58: #{feedforward.1} parent=50 // loop_exit
                  _
                %s273 = ssub.s32 16, 1
                loop: start=0, step=1, limit=1
                $region59: #{feedforward.1} parent=50 // loop_pre_header
                  _
                $region60: #{feedforward.1} parent=50 // loop_header
                  %s275 = sphi 0, %s279
                  %p276 = scmp.ge.s32.totalorder %s275, 1
                  %s280 = sphi %s213, %s213
                  %s281 = sphi %s211, %s211
                $region61: #{feedforward.1} parent=50 // loop_header_branch
                  %278 = sbr.rel (%p276) target = $region65
                $region62: #{feedforward.1} parent=50 // loop_body
                  %v282 = vld [vmem:[%s280] sm:%s273]
                  %283 = vst [vmem:[%s281] sm:%s273] %v282
                  %v284 = vld [vmem:[%s280 + $0x8] sm:%s273]
                  %285 = vst [vmem:[%s281 + $0x4] sm:%s273] %v284
                  %v286 = vld [vmem:[%s280 + $0x10] sm:%s273]
                  %287 = vst [vmem:[%s281 + $0x8] sm:%s273] %v286
                  %v288 = vld [vmem:[%s280 + $0x18] sm:%s273]
                  %289 = vst [vmem:[%s281 + $0xc] sm:%s273] %v288
                  %v290 = vld [vmem:[%s280 + $0x20] sm:%s273]
                  %291 = vst [vmem:[%s281 + $0x10] sm:%s273] %v290
                  %v292 = vld [vmem:[%s280 + $0x28] sm:%s273]
                  %293 = vst [vmem:[%s281 + $0x14] sm:%s273] %v292
                  %v294 = vld [vmem:[%s280 + $0x30] sm:%s273]
                  %295 = vst [vmem:[%s281 + $0x18] sm:%s273] %v294
                  %v296 = vld [vmem:[%s280 + $0x38] sm:%s273]
                  %297 = vst [vmem:[%s281 + $0x1c] sm:%s273] %v296
                  %v298 = vld [vmem:[%s280 + $0x40] sm:%s273]
                  %299 = vst [vmem:[%s281 + $0x20] sm:%s273] %v298
                  %v300 = vld [vmem:[%s280 + $0x48] sm:%s273]
                  %301 = vst [vmem:[%s281 + $0x24] sm:%s273] %v300
                  %v302 = vld [vmem:[%s280 + $0x50] sm:%s273]
                  %303 = vst [vmem:[%s281 + $0x28] sm:%s273] %v302
                  %v304 = vld [vmem:[%s280 + $0x58] sm:%s273]
                  %305 = vst [vmem:[%s281 + $0x2c] sm:%s273] %v304
                  %v306 = vld [vmem:[%s280 + $0x60] sm:%s273]
                  %307 = vst [vmem:[%s281 + $0x30] sm:%s273] %v306
                  %v308 = vld [vmem:[%s280 + $0x68] sm:%s273]
                  %309 = vst [vmem:[%s281 + $0x34] sm:%s273] %v308
                  %v310 = vld [vmem:[%s280 + $0x70] sm:%s273]
                  %311 = vst [vmem:[%s281 + $0x38] sm:%s273] %v310
                  %v312 = vld [vmem:[%s280 + $0x78] sm:%s273]
                  %313 = vst [vmem:[%s281 + $0x3c] sm:%s273] %v312
                $region63: #{feedforward.1} parent=50 // loop_footer
                  %s279 = sadd.s32 1, %s275
                $region64: #{feedforward.1} parent=50 // loop_footer_branch
                  %274 = sbr.rel target = $region60
                $region65: #{feedforward.1} parent=50 // loop_exit
                  _
              $region51: #{feedforward.1} parent=35 // pred_fallthru
                _
            $region36: #{feedforward.1} parent=31 // pred_fallthru
              _
            // Predicated region
            $region37: #{feedforward.1} parent=31 // pred_check
              _
            $region38: #{feedforward.1} parent=31 // pred_check_branch
              %219 = sbr.rel (0) target = $region40
            $region39: #{feedforward.1} parent=31 // pred_region
              %s221 = ssub.s32 16, 1
              loop: start=0, step=1, limit=1
              $region41: #{feedforward.1} parent=39 // loop_pre_header
                _
              $region42: #{feedforward.1} parent=39 // loop_header
                %s223 = sphi 0, %s227
                %p224 = scmp.ge.s32.totalorder %s223, 1
                %s228 = sphi %s213, %s213
                %s229 = sphi %s211, %s211
              $region43: #{feedforward.1} parent=39 // loop_header_branch
                %226 = sbr.rel (%p224) target = $region47
              $region44: #{feedforward.1} parent=39 // loop_body
                %v230 = vld [vmem:[%s228] sm:%s221]
                %231 = vst [vmem:[%s229] sm:%s221] %v230
                %v232 = vld [vmem:[%s228 + $0x8] sm:%s221]
                %233 = vst [vmem:[%s229 + $0x4] sm:%s221] %v232
                %v234 = vld [vmem:[%s228 + $0x10] sm:%s221]
                %235 = vst [vmem:[%s229 + $0x8] sm:%s221] %v234
                %v236 = vld [vmem:[%s228 + $0x18] sm:%s221]
                %237 = vst [vmem:[%s229 + $0xc] sm:%s221] %v236
                %v238 = vld [vmem:[%s228 + $0x20] sm:%s221]
                %239 = vst [vmem:[%s229 + $0x10] sm:%s221] %v238
                %v240 = vld [vmem:[%s228 + $0x28] sm:%s221]
                %241 = vst [vmem:[%s229 + $0x14] sm:%s221] %v240
                %v242 = vld [vmem:[%s228 + $0x30] sm:%s221]
                %243 = vst [vmem:[%s229 + $0x18] sm:%s221] %v242
                %v244 = vld [vmem:[%s228 + $0x38] sm:%s221]
                %245 = vst [vmem:[%s229 + $0x1c] sm:%s221] %v244
                %v246 = vld [vmem:[%s228 + $0x40] sm:%s221]
                %247 = vst [vmem:[%s229 + $0x20] sm:%s221] %v246
                %v248 = vld [vmem:[%s228 + $0x48] sm:%s221]
                %249 = vst [vmem:[%s229 + $0x24] sm:%s221] %v248
                %v250 = vld [vmem:[%s228 + $0x50] sm:%s221]
                %251 = vst [vmem:[%s229 + $0x28] sm:%s221] %v250
                %v252 = vld [vmem:[%s228 + $0x58] sm:%s221]
                %253 = vst [vmem:[%s229 + $0x2c] sm:%s221] %v252
                %v254 = vld [vmem:[%s228 + $0x60] sm:%s221]
                %255 = vst [vmem:[%s229 + $0x30] sm:%s221] %v254
                %v256 = vld [vmem:[%s228 + $0x68] sm:%s221]
                %257 = vst [vmem:[%s229 + $0x34] sm:%s221] %v256
                %v258 = vld [vmem:[%s228 + $0x70] sm:%s221]
                %259 = vst [vmem:[%s229 + $0x38] sm:%s221] %v258
                %v260 = vld [vmem:[%s228 + $0x78] sm:%s221]
                %261 = vst [vmem:[%s229 + $0x3c] sm:%s221] %v260
              $region45: #{feedforward.1} parent=39 // loop_footer
                %s227 = sadd.s32 1, %s223
              $region46: #{feedforward.1} parent=39 // loop_footer_branch
                %222 = sbr.rel target = $region42
              $region47: #{feedforward.1} parent=39 // loop_exit
                _
            $region40: #{feedforward.1} parent=31 // pred_fallthru
              _
          $region32: #{feedforward.1} parent=27 // pred_fallthru
            _
          %314 = vnop
        $region28: #{feedforward.1} parent=23 // pred_fallthru
          _
        // Predicated region
        $region66: #{feedforward.1} parent=23 // pred_check
          %p315 = pneg %p95
        $region67: #{feedforward.1} parent=23 // pred_check_branch
          %317 = sbr.rel (%p315) target = $region69
        $region68: #{feedforward.1} parent=23 // pred_region
          %p318 = scmp.lt.s32.totalorder %s19, 1
          %s319 = scalar_select %p318, %s19, 1
          %s320 = scalar_lea.vmem %s2, %s319
        $region69: #{feedforward.1} parent=23 // pred_fallthru
          _
        // Predicated region
        $region70: #{feedforward.1} parent=23 // pred_check
          %p321 = pneg %p121
        $region71: #{feedforward.1} parent=23 // pred_check_branch
          %323 = sbr.rel (%p321) target = $region73
        $region72: #{feedforward.1} parent=23 // pred_region
          %s324 = smul.u32 16, %s19
          %p325 = scmp.lt.s32.totalorder %s324, 31
          %s326 = scalar_select %p325, %s324, 31
          %s327 = smul.addr %s326, 4
          %s328 = scalar_lea.vmem %s3, %s327
          %s329 = smul.u32 16, %s19
        $region73: #{feedforward.1} parent=23 // pred_fallthru
          _
      $region24: #{feedforward.1} parent=5 // pred_fallthru
        _
      %p330 = scmp.le.s32.totalorder 1, %s11
      %p331 = scmp.lt.s32.totalorder %s11, 3
      %p332 = pnand %p330, %p331
      %p333 = pneg %p332
      // Predicated region
      $region74: #{feedforward.1} parent=5 // pred_check
        _
      $region75: #{feedforward.1} parent=5 // pred_check_branch
        %335 = sbr.rel (%p332) target = $region77
      $region76: #{feedforward.1} parent=5 // pred_region
        %s336 = ssub.s32 %s11, 1
        %s337 = sand.u32 %s62, 1
        %s338 = sand.u32 %s62, 1
        %s339 = smul.addr %s338, 64
        %s340 = scalar_lea.vmem [#allocation3], %s339
        // Predicated region
        $region78: #{feedforward.1} parent=76 // pred_check
          %p341 = pneg %p75
        $region79: #{feedforward.1} parent=76 // pred_check_branch
          %343 = sbr.rel (%p341) target = $region81
        $region80: #{feedforward.1} parent=76 // pred_region
          _
        $region81: #{feedforward.1} parent=76 // pred_fallthru
          _
        %s344 = smul.u32 2, %s20
        %p345 = scmp.lt.s32.totalorder %s344, 1
        %s346 = scalar_select %p345, %s344, 1
        %s347 = smul.addr %s346, 4
        %s348 = scalar_lea.vmem %s0, %s347
        %p349 = pneg %p49
        %p350 = pneg %p46
        %s351 = sand.u32 %s62, 1
        %s352 = sand.u32 %s62, 1
        %s353 = smul.addr %s352, 64
        %s354 = scalar_lea.vmem [#allocation3], %s353
        %p355 = pneg %p75
        %p356 = pneg %p72
        %p357 = scmp.lt.s32.totalorder %s21, 1
        %s358 = scalar_select %p357, %s21, 1
        %s359 = scalar_lea.vmem %s2, %s358
        %p360 = pneg %p101
        %p361 = pneg %p98
        %s362 = smul.u32 16, %s21
        %p363 = scmp.lt.s32.totalorder %s362, 31
        %s364 = scalar_select %p363, %s362, 31
        %s365 = smul.addr %s364, 4
        %s366 = scalar_lea.vmem %s3, %s365
        %p367 = pneg %p127
        %p368 = pneg %p124
        %p369 = pneg %p148
        %p370 = pneg %p145
        %p371 = pneg %p174
        %p372 = pneg %p171
        %s373 = smul.u32 2, %s20
        %p374 = scmp.lt.s32.totalorder %s373, 1
        %s375 = scalar_select %p374, %s373, 1
        %s376 = smul.addr %s375, 8
        %s377 = scalar_lea.vmem %s5, %s376
        %s378 = smul.u32 2, %s20
        %p379 = scmp.lt.s32.totalorder %s378, 1
        %s380 = scalar_select %p379, %s378, 1
        %s381 = smul.addr %s380, 4
        %s382 = scalar_lea.vmem %s0, %s381
        %s383 = smul.u32 2, %s20
        %p384 = scmp.lt.s32.totalorder %s21, 1
        %s385 = scalar_select %p384, %s21, 1
        %s386 = scalar_lea.vmem %s2, %s385
        %s387 = smul.u32 16, %s21
        %p388 = scmp.lt.s32.totalorder %s387, 31
        %s389 = scalar_select %p388, %s387, 31
        %s390 = smul.addr %s389, 4
        %s391 = scalar_lea.vmem %s3, %s390
        %s392 = smul.u32 16, %s21
        %s393 = smul.u32 2, %s20
        %p394 = scmp.lt.s32.totalorder %s393, 1
        %s395 = scalar_select %p394, %s393, 1
        %s396 = smul.addr %s395, 8
        %s397 = scalar_lea.vmem %s5, %s396
        %s398 = smul.u32 2, %s20
        %p399 = scmp.eq.s32.totalorder %s21, 0
        // Predicated region
        $region82: #{feedforward.1} parent=76 // pred_check
          %p400 = pneg %p399
        $region83: #{feedforward.1} parent=76 // pred_check_branch
          %402 = sbr.rel (%p400) target = $region85
        $region84: #{feedforward.1} parent=76 // pred_region
          %403 = vst [vmem:[#allocation2] sm:$0xff] 0.0
          %404 = vst [vmem:[#allocation2 + $0x8] sm:$0xff] 0.0
        $region85: #{feedforward.1} parent=76 // pred_fallthru
          _
        %v405 = vld [vmem:[%s382] sm:$0xf]
        %v406 = vld [vmem:[%s382 + $0x4] sm:$0xf]
        %v407 = vld [vmem:[%s340] sm:$0xf]
        %v408 = vld [vmem:[%s340 + $0x4] sm:$0xf]
        %v409 = vld [vmem:[%s340 + $0x8] sm:$0xf]
        %v410 = vld [vmem:[%s340 + $0xc] sm:$0xf]
        %v411 = vld [vmem:[%s340 + $0x10] sm:$0xf]
        %v412 = vld [vmem:[%s340 + $0x14] sm:$0xf]
        %v413 = vld [vmem:[%s340 + $0x18] sm:$0xf]
        %v414 = vld [vmem:[%s340 + $0x1c] sm:$0xf]
        %v415 = vld [vmem:[%s340 + $0x20] sm:$0xf]
        %v416 = vld [vmem:[%s340 + $0x24] sm:$0xf]
        %v417 = vld [vmem:[%s340 + $0x28] sm:$0xf]
        %v418 = vld [vmem:[%s340 + $0x2c] sm:$0xf]
        %v419 = vld [vmem:[%s340 + $0x30] sm:$0xf]
        %v420 = vld [vmem:[%s340 + $0x34] sm:$0xf]
        %v421 = vld [vmem:[%s340 + $0x38] sm:$0xf]
        %v422 = vld [vmem:[%s340 + $0x3c] sm:$0xf]
        %v423 = vld [vmem:[%s386] sm:$0x1]
        %v425 = vperm.slane %v423, 0
        %v429 = vunpack.c.l.b16 %v405
        %v430 = vunpack.c.l.b16 %v406
        %v431 = vpack.c.b16 %v430, %v429
        %v449 = vunpack.c.l.b16 %v407
        %v450 = vunpack.c.l.b16 %v408
        %v451 = vunpack.c.l.b16 %v409
        %v452 = vunpack.c.l.b16 %v410
        %v453 = vunpack.c.l.b16 %v411
        %v454 = vunpack.c.l.b16 %v412
        %v455 = vunpack.c.l.b16 %v413
        %v456 = vunpack.c.l.b16 %v414
        %v457 = vunpack.c.l.b16 %v415
        %v458 = vunpack.c.l.b16 %v416
        %v459 = vunpack.c.l.b16 %v417
        %v460 = vunpack.c.l.b16 %v418
        %v461 = vunpack.c.l.b16 %v419
        %v462 = vunpack.c.l.b16 %v420
        %v463 = vunpack.c.l.b16 %v421
        %v464 = vunpack.c.l.b16 %v422
        %v465 = vpack.c.b16 %v450, %v449
        %v466 = vpack.c.b16 %v452, %v451
        %v467 = vpack.c.b16 %v454, %v453
        %v468 = vpack.c.b16 %v456, %v455
        %v469 = vpack.c.b16 %v458, %v457
        %v470 = vpack.c.b16 %v460, %v459
        %v471 = vpack.c.b16 %v462, %v461
        %v472 = vpack.c.b16 %v464, %v463
        %481 = vmatpush.bf16.msra.mxu0 %v472
        %482 = vmatpush.bf16.msra.mxu0 %v471
        %483 = vmatpush.bf16.msra.mxu0 %v470
        %484 = vmatpush.bf16.msra.mxu0 %v469
        %485 = vmatpush.bf16.msra.mxu0 %v468
        %486 = vmatpush.bf16.msra.mxu0 %v467
        %487 = vmatpush.bf16.msra.mxu0 %v466
        %488 = vmatpush.bf16.msra.mxu0 %v465
        %489 = vmatmul.bf16.gmra.mxu0 %v431
        %v490 = vpop.f32.mrf.mxu0
        %v491 = vadd.f32 %v425, %v490
        %v492 = vpop.f32.mrf.mxu0
        %v493 = vadd.f32 %v425, %v492
        %494 = vdwg.mxu0
        %v495 = vmul.f32 %v491, 0.5
        %v496 = vmul.f32 %v493, 0.5
        %v497 = vmul.f32 %v491, 0.70710677
        %v498 = vmul.f32 %v493, 0.70710677
        %v499 = vmul.f32 %v497, %v497
        %v500 = vmin.f32 16.0, %v499
        %v501 = vmul.f32 %v500, 2.1237322e-06
        %v502 = vadd.f32 %v501, 0.00028619796
        %v503 = vmul.f32 %v500, %v502
        %v504 = vadd.f32 %v503, 0.0036580483
        %v505 = vmul.f32 %v500, %v504
        %v506 = vadd.f32 %v505, 0.05243302
        %v507 = vmul.f32 %v500, %v506
        %v508 = vadd.f32 %v507, 0.18741608
        %v509 = vmul.f32 %v500, %v508
        %v510 = vadd.f32 %v509, 1.1283791
        %v511 = vmul.f32 %v497, %v510
        %v512 = vmul.f32 %v500, 3.8918573e-05
        %v513 = vadd.f32 %v512, 0.001143296
        %v514 = vmul.f32 %v500, %v513
        %v515 = vadd.f32 %v514, 0.014752088
        %v516 = vmul.f32 %v500, %v515
        %v517 = vadd.f32 %v516, 0.112945676
        %v518 = vmul.f32 %v500, %v517
        %v519 = vadd.f32 %v518, 0.4994258
        %v520 = vmul.f32 %v500, %v519
        %v521 = vadd.f32 %v520, 1.0
        %v522 = vrcp.pop %v521
        %v523 = vmul.f32 %v521, %v522
        %v524 = vsub.f32 1.0, %v523
        %v525 = vmul.f32 %v522, %v524
        %v526 = vadd.f32 %v522, %v525
        %vm527 = vweird.f32 %v521
        %vm528 = vweird.f32 %v522
        %vm529 = vmor %vm527, %vm528
        %v530 = vsel %vm529, %v522, %v526
        %v531 = vand.u32 2147483647, %v521
        %vm532 = vcmp.eq.f32.partialorder %v531, 8.507059e+37
        %v533 = vand.u32 %v521, 2147483648
        %v534 = vor.u32 1.1754944e-38, %v533
        %v535 = vsel %vm532, %v534, %v530
        %v536 = vmul.f32 %v511, %v535
        %v537 = vmin.f32 %v536, 1.0
        %v538 = vmax.f32 %v537, -1.0
        %v539 = vmul.f32 %v498, %v498
        %v540 = vmin.f32 16.0, %v539
        %v541 = vmul.f32 %v540, 2.1237322e-06
        %v542 = vadd.f32 %v541, 0.00028619796
        %v543 = vmul.f32 %v540, %v542
        %v544 = vadd.f32 %v543, 0.0036580483
        %v545 = vmul.f32 %v540, %v544
        %v546 = vadd.f32 %v545, 0.05243302
        %v547 = vmul.f32 %v540, %v546
        %v548 = vadd.f32 %v547, 0.18741608
        %v549 = vmul.f32 %v540, %v548
        %v550 = vadd.f32 %v549, 1.1283791
        %v551 = vmul.f32 %v498, %v550
        %v552 = vmul.f32 %v540, 3.8918573e-05
        %v553 = vadd.f32 %v552, 0.001143296
        %v554 = vmul.f32 %v540, %v553
        %v555 = vadd.f32 %v554, 0.014752088
        %v556 = vmul.f32 %v540, %v555
        %v557 = vadd.f32 %v556, 0.112945676
        %v558 = vmul.f32 %v540, %v557
        %v559 = vadd.f32 %v558, 0.4994258
        %v560 = vmul.f32 %v540, %v559
        %v561 = vadd.f32 %v560, 1.0
        %v562 = vrcp.pop %v561
        %v563 = vmul.f32 %v561, %v562
        %v564 = vsub.f32 1.0, %v563
        %v565 = vmul.f32 %v562, %v564
        %v566 = vadd.f32 %v562, %v565
        %vm567 = vweird.f32 %v561
        %vm568 = vweird.f32 %v562
        %vm569 = vmor %vm567, %vm568
        %v570 = vsel %vm569, %v562, %v566
        %v571 = vand.u32 2147483647, %v561
        %vm572 = vcmp.eq.f32.partialorder %v571, 8.507059e+37
        %v573 = vand.u32 %v561, 2147483648
        %v574 = vor.u32 1.1754944e-38, %v573
        %v575 = vsel %vm572, %v574, %v570
        %v576 = vmul.f32 %v551, %v575
        %v577 = vmin.f32 %v576, 1.0
        %v578 = vmax.f32 %v577, -1.0
        %v579 = vadd.f32 %v538, 1.0
        %v580 = vadd.f32 %v578, 1.0
        %v581 = vmul.f32 %v495, %v579
        %v582 = vmul.f32 %v496, %v580
        %v583 = vld [vmem:[#allocation2] sm:$0xff]
        %v584 = vld [vmem:[#allocation2 + $0x8] sm:$0xff]
        %v585 = vpack.c.bf16 %v582, %v581
        %v586 = vld [vmem:[%s391] sm:$0xf]
        %v587 = vld [vmem:[%s391 + $0x4] sm:$0xf]
        %v588 = vld [vmem:[%s391 + $0x8] sm:$0xf]
        %v589 = vld [vmem:[%s391 + $0xc] sm:$0xf]
        %v590 = vld [vmem:[%s391 + $0x10] sm:$0xf]
        %v591 = vld [vmem:[%s391 + $0x14] sm:$0xf]
        %v592 = vld [vmem:[%s391 + $0x18] sm:$0xf]
        %v593 = vld [vmem:[%s391 + $0x1c] sm:$0xf]
        %v594 = vld [vmem:[%s391 + $0x20] sm:$0xf]
        %v595 = vld [vmem:[%s391 + $0x24] sm:$0xf]
        %v596 = vld [vmem:[%s391 + $0x28] sm:$0xf]
        %v597 = vld [vmem:[%s391 + $0x2c] sm:$0xf]
        %v598 = vld [vmem:[%s391 + $0x30] sm:$0xf]
        %v599 = vld [vmem:[%s391 + $0x34] sm:$0xf]
        %v600 = vld [vmem:[%s391 + $0x38] sm:$0xf]
        %v601 = vld [vmem:[%s391 + $0x3c] sm:$0xf]
        %v618 = vunpack.c.l.b16 %v586
        %v619 = vunpack.c.l.b16 %v587
        %v620 = vunpack.c.l.b16 %v588
        %v621 = vunpack.c.l.b16 %v589
        %v622 = vunpack.c.l.b16 %v590
        %v623 = vunpack.c.l.b16 %v591
        %v624 = vunpack.c.l.b16 %v592
        %v625 = vunpack.c.l.b16 %v593
        %v626 = vunpack.c.l.b16 %v594
        %v627 = vunpack.c.l.b16 %v595
        %v628 = vunpack.c.l.b16 %v596
        %v629 = vunpack.c.l.b16 %v597
        %v630 = vunpack.c.l.b16 %v598
        %v631 = vunpack.c.l.b16 %v599
        %v632 = vunpack.c.l.b16 %v600
        %v633 = vunpack.c.l.b16 %v601
        %v634 = vpack.c.b16 %v619, %v618
        %v635 = vpack.c.b16 %v621, %v620
        %v636 = vpack.c.b16 %v623, %v622
        %v637 = vpack.c.b16 %v625, %v624
        %v638 = vpack.c.b16 %v627, %v626
        %v639 = vpack.c.b16 %v629, %v628
        %v640 = vpack.c.b16 %v631, %v630
        %v641 = vpack.c.b16 %v633, %v632
        %650 = vmatpush.bf16.msra.mxu0 %v641
        %651 = vmatpush.bf16.msra.mxu0 %v640
        %652 = vmatpush.bf16.msra.mxu0 %v639
        %653 = vmatpush.bf16.msra.mxu0 %v638
        %654 = vmatpush.bf16.msra.mxu0 %v637
        %655 = vmatpush.bf16.msra.mxu0 %v636
        %656 = vmatpush.bf16.msra.mxu0 %v635
        %657 = vmatpush.bf16.msra.mxu0 %v634
        %658 = vmatmul.bf16.gmra.mxu0 %v585
        %v659 = vpop.f32.mrf.mxu0
        %v660 = vadd.f32 0.0, %v659
        %v661 = vpop.f32.mrf.mxu0
        %v662 = vadd.f32 0.0, %v661
        %663 = vdwg.mxu0
        %v664 = vadd.f32 %v583, %v660
        %v665 = vadd.f32 %v584, %v662
        %666 = vst [vmem:[#allocation2] sm:$0xff] %v664
        %667 = vst [vmem:[#allocation2 + $0x8] sm:$0xff] %v665
        %p668 = scmp.eq.s32.totalorder %s21, 1
        // Predicated region
        $region86: #{feedforward.1} parent=76 // pred_check
          %p669 = pneg %p668
        $region87: #{feedforward.1} parent=76 // pred_check_branch
          %671 = sbr.rel (%p669) target = $region89
        $region88: #{feedforward.1} parent=76 // pred_region
          %v672 = vld [vmem:[#allocation2] sm:$0xff]
          %v673 = vld [vmem:[#allocation2 + $0x8] sm:$0xff]
          %v674 = vld [vmem:[%s4] sm:$0x1]
          %v676 = vperm.slane %v674, 0
          %v678 = vadd.f32 %v672, %v676
          %v679 = vadd.f32 %v673, %v676
          %680 = vst [vmem:[%s397] sm:$0xff] %v678
          %681 = vst [vmem:[%s397 + $0x8] sm:$0xff] %v679
        $region89: #{feedforward.1} parent=76 // pred_fallthru
          _
        %s682 = smul.u32 2, %s20
        %p683 = scmp.lt.s32.totalorder %s682, 1
        %s684 = scalar_select %p683, %s682, 1
        %s685 = smul.addr %s684, 8
        %s686 = scalar_lea.vmem %s5, %s685
        // Predicated region
        $region90: #{feedforward.1} parent=76 // pred_check
          %p687 = pneg %p171
        $region91: #{feedforward.1} parent=76 // pred_check_branch
          %689 = sbr.rel (%p687) target = $region93
        $region92: #{feedforward.1} parent=76 // pred_region
          %s690 = smul.u32 2, %s20
        $region93: #{feedforward.1} parent=76 // pred_fallthru
          _
        // Predicated region
        $region94: #{feedforward.1} parent=76 // pred_check
          %p691 = pneg %p171
        $region95: #{feedforward.1} parent=76 // pred_check_branch
          %693 = sbr.rel (%p691) target = $region97
        $region96: #{feedforward.1} parent=76 // pred_region
          %s694 = smul.u32 2, %s20
          %p695 = scmp.lt.s32.totalorder %s694, 1
          %s696 = scalar_select %p695, %s694, 1
          %s697 = smul.addr %s696, 8
          %s698 = scalar_lea.vmem %s5, %s697
        $region97: #{feedforward.1} parent=76 // pred_fallthru
          _
      $region77: #{feedforward.1} parent=5 // pred_fallthru
        _
      %p699 = scmp.le.s32.totalorder 2, %s11
      // Predicated region
      $region98: #{feedforward.1} parent=5 // pred_check
        %p700 = pneg %p699
      $region99: #{feedforward.1} parent=5 // pred_check_branch
        %702 = sbr.rel (%p700) target = $region101
      $region100: #{feedforward.1} parent=5 // pred_region
        %s703 = ssub.s32 %s11, 2
      $region101: #{feedforward.1} parent=5 // pred_fallthru
        _
    $region6: #{feedforward.1} parent=1 // loop_footer
      %s15 = sadd.s32 1, %s11
    $region7: #{feedforward.1} parent=1 // loop_footer_branch
      %10 = sbr.rel target = $region3
    $region8: #{feedforward.1} parent=1 // loop_exit
      _

</llo_original>
